<compile_context>
chip_gen: v6e
topology: v6e:2x2x1
jax: 0.10.0
libtpu: 0.0.40
codegen_flags: <defaults>
</compile_context>

<pallas_src>
import functools

import jax
import jax.numpy as jnp
from jax.experimental import pallas as pl
from jax.experimental.pallas import tpu as pltpu


def _pos_embed_kernel(w_ref, o_ref):
    # w_ref: (1, L)  -- W_pos[:seq_len] flattened lane-dense (L = seq_len*d_model)
    # o_ref: (bt, L) -- output tile covering `bt` batch rows
    # Pure sublane-broadcast copy; no per-element VPU work (v5e has 1 vst slot).
    o_ref[...] = jnp.broadcast_to(w_ref[...], o_ref.shape)


@functools.partial(jax.jit, static_argnames=("seq_len",))
def pos_embed(w_pos: jax.Array, tokens: jax.Array, *, seq_len: int) -> jax.Array:
    """Returns W_pos[:seq_len] broadcast over the batch dim of `tokens`, then squeezed."""
    batch = tokens.shape[0]
    d_model = w_pos.shape[1]
    L = seq_len * d_model                        # lane-dense row length
    itemsize = jnp.dtype(w_pos.dtype).itemsize

    # Flatten the positional slice to one lane-dense row (tiny JAX-side op).
    w_row = w_pos[:seq_len].reshape(1, L)

    # Batch-tile: as many output rows as fit in ~6 MiB per buffer.
    budget_bytes = 6 * 1024 * 1024
    max_rows = max(1, budget_bytes // (L * itemsize))
    if batch <= max_rows:
        bt = batch                               # whole batch in one big tile
    else:
        bt = max(8, (max_rows // 8) * 8)         # keep sublane dim a multiple of 8

    grid = (pl.cdiv(batch, bt),)

    out = pl.pallas_call(
        _pos_embed_kernel,
        out_shape=jax.ShapeDtypeStruct((batch, L), w_pos.dtype),
        grid_spec=pltpu.PrefetchScalarGridSpec(
            num_scalar_prefetch=0,
            grid=grid,
            in_specs=[
                # Constant block index: the single flattened row, reused every step
                # (Pallas will not re-DMA it across grid iterations).
                pl.BlockSpec((1, L), lambda b: (0, 0)),
            ],
            out_specs=pl.BlockSpec((bt, L), lambda b: (b, 0)),
        ),
        compiler_params=pltpu.CompilerParams(
            dimension_semantics=("parallel",),   # shard batch tiles across v7x's 2 TCs
        ),
    )(w_row)

    # Reshape back to (batch, seq_len, d_model) -- contiguous, effectively free.
    out = out.reshape(batch, seq_len, d_model)
    # Match torch's .squeeze(): drop any size-1 dims.
    return jnp.squeeze(out)


if __name__ == "__main__":
    # Config (analogue of cfg): n_ctx=16, d_model=32, init_range=0.02
    n_ctx, d_model, init_range = 16, 32, 0.02
    batch, seq_len = 2, 8

    key = jax.random.PRNGKey(0)
    k_w, k_tok = jax.random.split(key)

    # Deterministic parameter init: W_pos ~ Normal(0, init_range)
    W_pos = (init_range * jax.random.normal(k_w, (n_ctx, d_model))).astype(jnp.float32)
    tokens = jax.random.randint(k_tok, (batch, seq_len), 0, n_ctx, dtype=jnp.int32)

    out = pos_embed(W_pos, tokens, seq_len=seq_len)
    out = jax.block_until_ready(out)

    # Reference check (pure JAX): broadcast of W_pos[:seq_len] over batch.
    ref = jnp.squeeze(
        jnp.broadcast_to(W_pos[:seq_len][None], (batch, seq_len, d_model))
    )
    assert out.shape == ref.shape, (out.shape, ref.shape)
    assert jnp.allclose(out, ref), "mismatch vs reference"

    print("KERNEL_OK")
</pallas_src>

<mosaic_0001>
module attributes {stable_mosaic.version = 11 : i64} {
  func.func @_pos_embed_kernel(%arg0: i32, %arg1: memref<1x256xf32, #tpu.memory_space<vmem>>, %arg2: memref<2x256xf32, #tpu.memory_space<vmem>>) attributes {dimension_semantics = [#tpu.dimension_semantics<parallel>], iteration_bounds = array<i64: 1>, scalar_prefetch = 0 : i64, scratch_operands = 0 : i64, tpu.core_type = #tpu.core_type<tc>, window_params = [{pipeline_mode = #tpu.pipeline_mode<synchronous>, transform_indices = @transform_0, window_bounds = array<i64: 1, 256>}, {transform_indices = @transform_1, window_bounds = array<i64: 2, 256>}]} {
    %c0 = arith.constant 0 : index
    %c0_0 = arith.constant 0 : index
    %0 = vector.load %arg1[%c0, %c0_0] : memref<1x256xf32, #tpu.memory_space<vmem>>, vector<1x256xf32>
    %1 = vector.shape_cast %0 : vector<1x256xf32> to vector<1x256xf32>
    %2 = vector.broadcast %1 : vector<1x256xf32> to vector<2x256xf32>
    %c0_1 = arith.constant 0 : index
    %c0_2 = arith.constant 0 : index
    %3 = vector.load %arg2[%c0_1, %c0_2] : memref<2x256xf32, #tpu.memory_space<vmem>>, vector<2x256xf32>
    tpu.vector_store %arg2[%c0_1, %c0_2], %2 {strides = array<i32>} : memref<2x256xf32, #tpu.memory_space<vmem>>, vector<2x256xf32>,
    return
  }
  func.func @transform_0(%arg0: i32) -> (i32, i32) {
    %c0_i32 = arith.constant 0 : i32
    %c0_i32_0 = arith.constant 0 : i32
    %c0_i32_1 = arith.constant 0 : i32
    return %c0_i32, %c0_i32_0 : i32, i32
  }
  func.func @transform_1(%arg0: i32) -> (i32, i32) {
    %c0_i32 = arith.constant 0 : i32
    %c0_i32_0 = arith.constant 0 : i32
    return %arg0, %c0_i32 : i32, i32
  }
}

</mosaic_0001>

<llo_original>
// kernel: pos_embed.1
$region0: #{pos_embed.1}
  #allocation0 [shape = 'u32[]', space=smem, size = 0x4, offset = 0x4, fixed_abs, tag = 'smem constant byte address 0x4 - core index']
  #allocation1 [shape = 'u32[144,128]{1,0:T(1,128)}', space=vmem, size = 0x12000, scoped, tag = 'internal scratch']
  %s0 = inlined_call_operand.vmem [shape: f32[1,256], index: 0, kind: input, shape index: {}]
  %s1 = inlined_call_operand.vmem [shape: f32[2,256], index: 1, kind: output, shape index: {}]
  %s2 = sld [smem:[#allocation0]]
  $region14: #{pos_embed.1} parent=0
    _
  %s4 = ssub.s32 1, %s2
  %s5 = scalar_select 0, %s4, %s2
  // Predicated region
  $region2: #{pos_embed.1} parent=0 // pred_check
    _
  $region3: #{pos_embed.1} parent=0 // pred_check_branch
    %7 = sbr.rel (0) target = $region5
  $region4: #{pos_embed.1} parent=0 // pred_region
    _
  $region5: #{pos_embed.1} parent=0 // pred_fallthru
    _
  %v8 = vld [vmem:[%s0] sm:$0x3]
  %v10 = vlaneseq
  %v11 = vshrl.u32 %v10, 7
  %v12 = vsub.s32 0, %v11
  %v13 = vrot.slane %v8, %v12
  %v14 = vlaneseq
  %v15 = vshrl.u32 %v14, 7
  %v16 = vsub.s32 1, %v15
  %v17 = vrot.slane %v8, %v16
  %v18 = vcombine.low %v13, %v17
  %v20 = vunpack.c.l.s4 1983009808
  %v21 = vunpack.c.0.s8 %v20
  %v22 = vlaneseq
  %v23 = vshrl.u32 %v22, 7
  %v24 = vsub.s32 %v21, %v23
  %v25 = vrot.slane %v18, %v24
  %27 = vst [vmem:[%s1] sm:$0xf] %v25
  // Predicated region
  $region6: #{pos_embed.1} parent=0 // pred_check
    _
  $region7: #{pos_embed.1} parent=0 // pred_check_branch
    %29 = sbr.rel (0) target = $region9
  $region8: #{pos_embed.1} parent=0 // pred_region
    _
  $region9: #{pos_embed.1} parent=0 // pred_fallthru
    _
  // Predicated region
  $region10: #{pos_embed.1} parent=0 // pred_check
    _
  $region11: #{pos_embed.1} parent=0 // pred_check_branch
    %31 = sbr.rel (0) target = $region13
  $region12: #{pos_embed.1} parent=0 // pred_region
    _
  $region13: #{pos_embed.1} parent=0 // pred_fallthru
    _

</llo_original>
